<compile_context>
chip_gen: v5e
topology: v5e:2x2
jax: 0.10.0
libtpu: 0.0.40
codegen_flags: <defaults>
</compile_context>

<pallas_src>
import functools

import jax
import jax.numpy as jnp
from jax import lax
from jax.experimental import pallas as pl
from jax.experimental.pallas import tpu as pltpu

_MIB = 1024 * 1024


def _interp_matrix(in_size: int, out_size: int) -> jnp.ndarray:
    """(out_size, in_size) linear-interp matrix, align_corners=True (exact)."""
    if in_size == 1:
        return jnp.ones((out_size, 1), dtype=jnp.float32)
    i = jnp.arange(out_size, dtype=jnp.float32)
    src = i * (in_size - 1) / (out_size - 1)
    lo = jnp.clip(jnp.floor(src), 0, in_size - 1).astype(jnp.int32)
    hi = jnp.minimum(lo + 1, in_size - 1)
    frac = src - lo.astype(jnp.float32)
    oh_lo = jax.nn.one_hot(lo, in_size, dtype=jnp.float32)
    oh_hi = jax.nn.one_hot(hi, in_size, dtype=jnp.float32)
    return (1.0 - frac)[:, None] * oh_lo + frac[:, None] * oh_hi


def _tpu_vmem_capacity_bytes(default: int = 64 * _MIB) -> int:
    """Physical per-TensorCore VMEM; conservative (v7x) fallback if query fails."""
    try:
        return int(pltpu.get_tpu_info().vmem_capacity_bytes)
    except Exception:
        return default


# ----------------------------------------------------------------------------
# Kernels
# ----------------------------------------------------------------------------
def _up_plane_kernel(x_ref, wh_ref, wwt_ref, o_ref, tmp_ref, *,
                     cb, H, height_first, mxu_dtype):
    # x_ref  : (1, cb*H,  W )   cb folded (n,c) planes
    # wh_ref : (2H, H)          height interp matrix
    # wwt_ref: (W, 2W)          width interp matrix, pre-transposed
    # o_ref  : (1, cb*2H, 2W)
    # tmp_ref: (cb*2H, W) f32 if height_first else (cb*H, 2W) f32
    Ho = 2 * H
    wh = wh_ref[...]
    wwt = wwt_ref[...]

    if height_first:
        # Per-plane height pass into the f32 scratch, then one big width matmul.
        if cb == 1:
            tmp_ref[...] = jnp.dot(wh, x_ref[0],
                                   preferred_element_type=jnp.float32)
        else:
            def h_pass(c, carry):
                src = x_ref[0, pl.ds(pl.multiple_of(c * H, H), H), :]
                tmp_ref[pl.ds(pl.multiple_of(c * Ho, Ho), Ho), :] = jnp.dot(
                    wh, src, preferred_element_type=jnp.float32)
                return carry
            lax.fori_loop(0, cb, h_pass, 0, unroll=min(cb, 8))
        o_ref[0] = jnp.dot(tmp_ref[...].astype(mxu_dtype), wwt,
                           preferred_element_type=jnp.float32).astype(o_ref.dtype)
    else:
        # One big width matmul over the folded (cb*H, W) block (f32 accumulate),
        # then per-plane height pass.
        tmp_ref[...] = jnp.dot(x_ref[0], wwt, preferred_element_type=jnp.float32)
        if cb == 1:
            o_ref[0] = jnp.dot(wh, tmp_ref[...].astype(mxu_dtype),
                               preferred_element_type=jnp.float32).astype(o_ref.dtype)
        else:
            def h_pass(c, carry):
                src = tmp_ref[pl.ds(pl.multiple_of(c * H, H), H), :].astype(mxu_dtype)
                o_ref[0, pl.ds(pl.multiple_of(c * Ho, Ho), Ho), :] = jnp.dot(
                    wh, src, preferred_element_type=jnp.float32).astype(o_ref.dtype)
                return carry
            lax.fori_loop(0, cb, h_pass, 0, unroll=min(cb, 8))


def _up_rowband_kernel(x_ref, wh_ref, wwt_ref, o_ref, tmp_ref, *, mxu_dtype):
    # x_ref  : (1, H, W)      full input plane (fetched once per plane)
    # wh_ref : (2*rh, H)      row band of the height interp matrix
    # wwt_ref: (W, 2W)
    # o_ref  : (1, 2*rh, 2W)  output row band
    # tmp_ref: (2*rh, W) f32
    tmp_ref[...] = jnp.dot(wh_ref[...], x_ref[0],
                           preferred_element_type=jnp.float32)
    o_ref[0] = jnp.dot(tmp_ref[...].astype(mxu_dtype), wwt_ref[...],
                       preferred_element_type=jnp.float32).astype(o_ref.dtype)


# ----------------------------------------------------------------------------
# Tiling heuristics
# ----------------------------------------------------------------------------
def _pick_plane_block(num_planes: int, per_plane_bytes: int,
                      budget_bytes: int, num_tc: int) -> int:
    """Largest divisor of num_planes whose block fits the VMEM budget.
    On multi-TensorCore chips (v7x) prefer divisors leaving a TC-balanced grid."""
    max_fit = max(1, budget_bytes // max(per_plane_bytes, 1))
    candidates = [cb for cb in range(1, num_planes + 1)
                  if num_planes % cb == 0 and cb <= max_fit]
    if not candidates:
        return 1
    if num_tc > 1:
        balanced = [cb for cb in candidates if (num_planes // cb) % num_tc == 0]
        if balanced:
            return max(balanced)
    return max(candidates)


def _pick_row_tile(H: int, W: int, in_bytes: int, out_bytes: int,
                   budget_bytes: int) -> int:
    """Largest rh dividing H (2*rh multiple of 8) whose row-banded step fits."""
    Wo = 2 * W
    best = None
    for rh in range(4, H + 1, 4):
        if H % rh:
            continue
        step = (2 * H * W * in_bytes            # input plane, double-buffered
                + 2 * (2 * rh) * H * in_bytes   # Wh band, double-buffered
                + 2 * W * Wo * in_bytes         # Ww^T, double-buffered
                + 2 * (2 * rh) * Wo * out_bytes # output band, double-buffered
                + (2 * rh) * W * 4)             # f32 scratch
        if step <= budget_bytes:
            best = rh
    if best is not None:
        return best
    for rh in range(4, H + 1, 4):               # smallest legal tile fallback
        if H % rh == 0:
            return rh
    return H


# ----------------------------------------------------------------------------
# Wrapper
# ----------------------------------------------------------------------------
def up_bilinear_2x(x: jnp.ndarray, *, use_bf16: bool = False,
                   vmem_budget_bytes: int | None = None,
                   row_tile: int | None = None) -> jnp.ndarray:
    """Bilinear 2x upsample, align_corners=True, NCHW layout."""
    N, C, H, W = x.shape
    Ho, Wo = 2 * H, 2 * W
    out_dtype = x.dtype
    # bf16 only affects the MXU operand dtype; the intermediate stays f32 so the
    # interp taps are not double-rounded.  Exact f32 by default.
    mxu_dtype = jnp.bfloat16 if use_bf16 else jnp.float32
    in_bytes = jnp.dtype(mxu_dtype).itemsize
    out_bytes = jnp.dtype(out_dtype).itemsize

    # ---- generation-aware VMEM budgeting ------------------------------------
    physical_vmem = _tpu_vmem_capacity_bytes()
    # Only v7x (64 MiB / TC) has two TensorCores; 128-MiB parts (v5e/v6e) have one.
    num_tc = 2 if physical_vmem <= 80 * _MIB else 1
    if vmem_budget_bytes is None:
        # ~3/8 of physical: 24 MiB on v7x, 48 MiB on v5e/v6e.
        vmem_budget_bytes = max(16 * _MIB, min(physical_vmem * 3 // 8, 48 * _MIB))
    vmem_limit_cap = max(32 * _MIB, min(physical_vmem - 8 * _MIB, 100 * _MIB))

    wh = _interp_matrix(H, Ho).astype(mxu_dtype)       # (2H, H)
    wwt = _interp_matrix(W, Wo).T.astype(mxu_dtype)    # (W, 2W), pre-transposed

    planes = N * C
    weights_db = 2 * (Ho * H + W * Wo) * in_bytes      # double-buffered weights
    # Per-plane per-step VMEM: db input + db output + f32 intermediate.
    per_plane = H * W * (2 * in_bytes + 8 * out_bytes + 8)
    avail = vmem_budget_bytes - weights_db

    if row_tile is None and avail >= per_plane:
        # ---------------- plane-folded path ----------------
        cb = _pick_plane_block(planes, per_plane, avail, num_tc)
        G = planes // cb
        height_first = H > W            # cheaper matmul order for rectangular maps
        tmp_shape = (cb * Ho, W) if height_first else (cb * H, Wo)

        # Fold cb contiguous (n,c) planes into the row dim — free reshape of the
        # contiguous NCHW array, no data movement.
        x_folded = x.astype(mxu_dtype).reshape(G, cb * H, W)
        kernel = functools.partial(_up_plane_kernel, cb=cb, H=H,
                                   height_first=height_first, mxu_dtype=mxu_dtype)

        if height_first:
            flops = planes * (4 * H * H * W + 8 * H * W * W)
        else:
            flops = planes * (4 * H * W * W + 8 * H * H * W)
        bytes_accessed = (planes * H * W * (in_bytes + 4 * out_bytes)
                          + (Ho * H + W * Wo) * in_bytes)
        step_vmem = cb * per_plane + weights_db
        vmem_limit = int(min(max(32 * _MIB, step_vmem * 5 // 4), vmem_limit_cap))

        y = pl.pallas_call(
            kernel,
            out_shape=jax.ShapeDtypeStruct((G, cb * Ho, Wo), out_dtype),
            grid_spec=pltpu.PrefetchScalarGridSpec(
                num_scalar_prefetch=0,
                grid=(G,),
                in_specs=[
                    pl.BlockSpec((1, cb * H, W), lambda g: (g, 0, 0)),
                    pl.BlockSpec((Ho, H), lambda g: (0, 0)),
                    pl.BlockSpec((W, Wo), lambda g: (0, 0)),
                ],
                out_specs=pl.BlockSpec((1, cb * Ho, Wo), lambda g: (g, 0, 0)),
                scratch_shapes=[pltpu.VMEM(tmp_shape, jnp.float32)],
            ),
            compiler_params=pltpu.CompilerParams(
                dimension_semantics=("parallel",),
                vmem_limit_bytes=vmem_limit,
            ),
            cost_estimate=pl.CostEstimate(flops=int(flops), transcendentals=0,
                                          bytes_accessed=int(bytes_accessed)),
        )(x_folded, wh, wwt)
        return y.reshape(N, C, Ho, Wo)

    # ---------------- row-banded path (large planes / forced) ----------------
    if row_tile is not None:
        rh = int(row_tile)
        if H % rh or (2 * rh) % 8:
            raise ValueError("row_tile must divide H and keep 2*row_tile a multiple of 8")
    else:
        rh = _pick_row_tile(H, W, in_bytes, out_bytes, vmem_budget_bytes)
    R = H // rh

    x_planes = x.astype(mxu_dtype).reshape(planes, H, W)
    kernel = functools.partial(_up_rowband_kernel, mxu_dtype=mxu_dtype)

    flops = planes * (4 * H * H * W + 8 * H * W * W)   # always height-first here
    bytes_accessed = (planes * H * W * (in_bytes + 4 * out_bytes)
                      + planes * Ho * H * in_bytes + W * Wo * in_bytes)
    step_vmem = (2 * H * W * in_bytes + 2 * (2 * rh) * H * in_bytes
                 + 2 * W * Wo * in_bytes + 2 * (2 * rh) * Wo * out_bytes
                 + (2 * rh) * W * 4)
    vmem_limit = int(min(max(32 * _MIB, step_vmem * 5 // 4), vmem_limit_cap))

    y = pl.pallas_call(
        kernel,
        out_shape=jax.ShapeDtypeStruct((planes, Ho, Wo), out_dtype),
        grid_spec=pltpu.PrefetchScalarGridSpec(
            num_scalar_prefetch=0,
            grid=(planes, R),
            in_specs=[
                # Constant index across r -> the plane is DMA'd once per plane.
                pl.BlockSpec((1, H, W), lambda p, r: (p, 0, 0)),
                # Banded window of the height interp matrix.
                pl.BlockSpec((2 * rh, H), lambda p, r: (r, 0)),
                pl.BlockSpec((W, Wo), lambda p, r: (0, 0)),
            ],
            out_specs=pl.BlockSpec((1, 2 * rh, Wo), lambda p, r: (p, r, 0)),
            scratch_shapes=[pltpu.VMEM((2 * rh, W), jnp.float32)],
        ),
        compiler_params=pltpu.CompilerParams(
            dimension_semantics=("parallel", "arbitrary"),
            vmem_limit_bytes=vmem_limit,
        ),
        cost_estimate=pl.CostEstimate(flops=int(flops), transcendentals=0,
                                      bytes_accessed=int(bytes_accessed)),
    )(x_planes, wh, wwt)
    return y.reshape(N, C, Ho, Wo)


if __name__ == "__main__":
    key = jax.random.PRNGKey(0)

    # Test 1: default (plane-folded) path at the module's nominal small shape.
    N, C, H, W = 2, 4, 16, 16
    x = jax.random.normal(key, (N, C, H, W), dtype=jnp.float32)
    y = jax.block_until_ready(up_bilinear_2x(x))
    wh = _interp_matrix(H, 2 * H)
    ww = _interp_matrix(W, 2 * W)
    y_ref = jnp.einsum("ph,nchw,qw->ncpq", wh, x, ww)
    assert y.shape == (N, C, 2 * H, 2 * W)
    assert jnp.allclose(y, y_ref, atol=1e-5, rtol=1e-5)

    # Test 2: exercise the row-banded large-plane path explicitly.
    N2, C2, H2, W2 = 1, 2, 64, 32
    x2 = jax.random.normal(jax.random.PRNGKey(0), (N2, C2, H2, W2), dtype=jnp.float32)
    y2 = jax.block_until_ready(up_bilinear_2x(x2, row_tile=16))
    wh2 = _interp_matrix(H2, 2 * H2)
    ww2 = _interp_matrix(W2, 2 * W2)
    y2_ref = jnp.einsum("ph,nchw,qw->ncpq", wh2, x2, ww2)
    assert y2.shape == (N2, C2, 2 * H2, 2 * W2)
    assert jnp.allclose(y2, y2_ref, atol=1e-5, rtol=1e-5)

    print("KERNEL_OK")
</pallas_src>

<mosaic_0001>
module attributes {stable_mosaic.version = 11 : i64} {
  func.func @_up_plane_kernel(%arg0: i32, %arg1: memref<1x64x16xf32, #tpu.memory_space<vmem>>, %arg2: memref<32x16xf32, #tpu.memory_space<vmem>>, %arg3: memref<16x32xf32, #tpu.memory_space<vmem>>, %arg4: memref<1x128x32xf32, #tpu.memory_space<vmem>>, %arg5: memref<64x32xf32, #tpu.memory_space<vmem>>) attributes {dimension_semantics = [#tpu.dimension_semantics<parallel>], iteration_bounds = array<i64: 2>, scalar_prefetch = 0 : i64, scratch_operands = 1 : i64, tpu.core_type = #tpu.core_type<tc>, window_params = [{transform_indices = @transform_0, window_bounds = array<i64: 1, 64, 16>}, {pipeline_mode = #tpu.pipeline_mode<synchronous>, transform_indices = @transform_1, window_bounds = array<i64: 32, 16>}, {pipeline_mode = #tpu.pipeline_mode<synchronous>, transform_indices = @transform_2, window_bounds = array<i64: 16, 32>}, {transform_indices = @transform_3, window_bounds = array<i64: 1, 128, 32>}]} {
    %c0 = arith.constant 0 : index
    %c0_0 = arith.constant 0 : index
    %0 = vector.load %arg2[%c0, %c0_0] : memref<32x16xf32, #tpu.memory_space<vmem>>, vector<32x16xf32>
    %c0_1 = arith.constant 0 : index
    %c0_2 = arith.constant 0 : index
    %1 = vector.load %arg3[%c0_1, %c0_2] : memref<16x32xf32, #tpu.memory_space<vmem>>, vector<16x32xf32>
    %c0_3 = arith.constant 0 : index
    %c0_4 = arith.constant 0 : index
    %c0_5 = arith.constant 0 : index
    %2 = vector.load %arg1[%c0_3, %c0_4, %c0_5] : memref<1x64x16xf32, #tpu.memory_space<vmem>>, vector<1x64x16xf32>
    %3 = vector.shape_cast %2 : vector<1x64x16xf32> to vector<64x16xf32>
    %cst = arith.constant dense<0.000000e+00> : vector<64x32xf32>
    %4 = tpu.matmul %3, %1, %cst {dimension_numbers = #tpu.dot_dimension_numbers<[1], [0], [0], [1], [0, 0, 1, 1], [], []>} : vector<64x16xf32>, vector<16x32xf32>, vector<64x32xf32> -> vector<64x32xf32>
    %c0_6 = arith.constant 0 : index
    %c0_7 = arith.constant 0 : index
    %5 = vector.load %arg5[%c0_6, %c0_7] : memref<64x32xf32, #tpu.memory_space<vmem>>, vector<64x32xf32>
    tpu.vector_store %arg5[%c0_6, %c0_7], %4 {strides = array<i32>} : memref<64x32xf32, #tpu.memory_space<vmem>>, vector<64x32xf32>,
    %c0_i32 = arith.constant 0 : i32
    %c16_i32 = arith.constant 16 : i32
    %6 = arith.muli %c0_i32, %c16_i32 : i32
    %7 = tpu.assume_multiple %6, 16 : i32
    %8 = arith.index_cast %7 : i32 to index
    %c0_8 = arith.constant 0 : index
    %9 = vector.load %arg5[%8, %c0_8] : memref<64x32xf32, #tpu.memory_space<vmem>>, vector<16x32xf32>
    %cst_9 = arith.constant dense<0.000000e+00> : vector<32x32xf32>
    %10 = tpu.matmul %0, %9, %cst_9 {dimension_numbers = #tpu.dot_dimension_numbers<[1], [0], [0], [1], [0, 0, 1, 1], [], []>} : vector<32x16xf32>, vector<16x32xf32>, vector<32x32xf32> -> vector<32x32xf32>
    %c32_i32 = arith.constant 32 : i32
    %11 = arith.muli %c0_i32, %c32_i32 : i32
    %12 = tpu.assume_multiple %11, 32 : i32
    %c0_10 = arith.constant 0 : index
    %13 = arith.index_cast %12 : i32 to index
    %c0_11 = arith.constant 0 : index
    %14 = vector.load %arg4[%c0_10, %13, %c0_11] : memref<1x128x32xf32, #tpu.memory_space<vmem>>, vector<1x32x32xf32>
    %15 = vector.shape_cast %14 : vector<1x32x32xf32> to vector<32x32xf32>
    %16 = vector.shape_cast %10 : vector<32x32xf32> to vector<1x32x32xf32>
    tpu.vector_store %arg4[%c0_10, %13, %c0_11], %16 {strides = array<i32>} : memref<1x128x32xf32, #tpu.memory_space<vmem>>, vector<1x32x32xf32>,
    %c1_i32 = arith.constant 1 : i32
    %c16_i32_12 = arith.constant 16 : i32
    %17 = arith.muli %c1_i32, %c16_i32_12 : i32
    %18 = tpu.assume_multiple %17, 16 : i32
    %19 = arith.index_cast %18 : i32 to index
    %c0_13 = arith.constant 0 : index
    %20 = vector.load %arg5[%19, %c0_13] : memref<64x32xf32, #tpu.memory_space<vmem>>, vector<16x32xf32>
    %cst_14 = arith.constant dense<0.000000e+00> : vector<32x32xf32>
    %21 = tpu.matmul %0, %20, %cst_14 {dimension_numbers = #tpu.dot_dimension_numbers<[1], [0], [0], [1], [0, 0, 1, 1], [], []>} : vector<32x16xf32>, vector<16x32xf32>, vector<32x32xf32> -> vector<32x32xf32>
    %c32_i32_15 = arith.constant 32 : i32
    %22 = arith.muli %c1_i32, %c32_i32_15 : i32
    %23 = tpu.assume_multiple %22, 32 : i32
    %c0_16 = arith.constant 0 : index
    %24 = arith.index_cast %23 : i32 to index
    %c0_17 = arith.constant 0 : index
    %25 = vector.load %arg4[%c0_16, %24, %c0_17] : memref<1x128x32xf32, #tpu.memory_space<vmem>>, vector<1x32x32xf32>
    %26 = vector.shape_cast %25 : vector<1x32x32xf32> to vector<32x32xf32>
    %27 = vector.shape_cast %21 : vector<32x32xf32> to vector<1x32x32xf32>
    tpu.vector_store %arg4[%c0_16, %24, %c0_17], %27 {strides = array<i32>} : memref<1x128x32xf32, #tpu.memory_space<vmem>>, vector<1x32x32xf32>,
    %c2_i32 = arith.constant 2 : i32
    %c16_i32_18 = arith.constant 16 : i32
    %28 = arith.muli %c2_i32, %c16_i32_18 : i32
    %29 = tpu.assume_multiple %28, 16 : i32
    %30 = arith.index_cast %29 : i32 to index
    %c0_19 = arith.constant 0 : index
    %31 = vector.load %arg5[%30, %c0_19] : memref<64x32xf32, #tpu.memory_space<vmem>>, vector<16x32xf32>
    %cst_20 = arith.constant dense<0.000000e+00> : vector<32x32xf32>
    %32 = tpu.matmul %0, %31, %cst_20 {dimension_numbers = #tpu.dot_dimension_numbers<[1], [0], [0], [1], [0, 0, 1, 1], [], []>} : vector<32x16xf32>, vector<16x32xf32>, vector<32x32xf32> -> vector<32x32xf32>
    %c32_i32_21 = arith.constant 32 : i32
    %33 = arith.muli %c2_i32, %c32_i32_21 : i32
    %34 = tpu.assume_multiple %33, 32 : i32
    %c0_22 = arith.constant 0 : index
    %35 = arith.index_cast %34 : i32 to index
    %c0_23 = arith.constant 0 : index
    %36 = vector.load %arg4[%c0_22, %35, %c0_23] : memref<1x128x32xf32, #tpu.memory_space<vmem>>, vector<1x32x32xf32>
    %37 = vector.shape_cast %36 : vector<1x32x32xf32> to vector<32x32xf32>
    %38 = vector.shape_cast %32 : vector<32x32xf32> to vector<1x32x32xf32>
    tpu.vector_store %arg4[%c0_22, %35, %c0_23], %38 {strides = array<i32>} : memref<1x128x32xf32, #tpu.memory_space<vmem>>, vector<1x32x32xf32>,
    %c3_i32 = arith.constant 3 : i32
    %c16_i32_24 = arith.constant 16 : i32
    %39 = arith.muli %c3_i32, %c16_i32_24 : i32
    %40 = tpu.assume_multiple %39, 16 : i32
    %41 = arith.index_cast %40 : i32 to index
    %c0_25 = arith.constant 0 : index
    %42 = vector.load %arg5[%41, %c0_25] : memref<64x32xf32, #tpu.memory_space<vmem>>, vector<16x32xf32>
    %cst_26 = arith.constant dense<0.000000e+00> : vector<32x32xf32>
    %43 = tpu.matmul %0, %42, %cst_26 {dimension_numbers = #tpu.dot_dimension_numbers<[1], [0], [0], [1], [0, 0, 1, 1], [], []>} : vector<32x16xf32>, vector<16x32xf32>, vector<32x32xf32> -> vector<32x32xf32>
    %c32_i32_27 = arith.constant 32 : i32
    %44 = arith.muli %c3_i32, %c32_i32_27 : i32
    %45 = tpu.assume_multiple %44, 32 : i32
    %c0_28 = arith.constant 0 : index
    %46 = arith.index_cast %45 : i32 to index
    %c0_29 = arith.constant 0 : index
    %47 = vector.load %arg4[%c0_28, %46, %c0_29] : memref<1x128x32xf32, #tpu.memory_space<vmem>>, vector<1x32x32xf32>
    %48 = vector.shape_cast %47 : vector<1x32x32xf32> to vector<32x32xf32>
    %49 = vector.shape_cast %43 : vector<32x32xf32> to vector<1x32x32xf32>
    tpu.vector_store %arg4[%c0_28, %46, %c0_29], %49 {strides = array<i32>} : memref<1x128x32xf32, #tpu.memory_space<vmem>>, vector<1x32x32xf32>,
    %c4_i32 = arith.constant 4 : i32
    return
  }
  func.func @transform_0(%arg0: i32) -> (i32, i32, i32) {
    %c0_i32 = arith.constant 0 : i32
    %c0_i32_0 = arith.constant 0 : i32
    %c0_i32_1 = arith.constant 0 : i32
    return %arg0, %c0_i32, %c0_i32_0 : i32, i32, i32
  }
  func.func @transform_1(%arg0: i32) -> (i32, i32) {
    %c0_i32 = arith.constant 0 : i32
    %c0_i32_0 = arith.constant 0 : i32
    %c0_i32_1 = arith.constant 0 : i32
    return %c0_i32, %c0_i32_0 : i32, i32
  }
  func.func @transform_2(%arg0: i32) -> (i32, i32) {
    %c0_i32 = arith.constant 0 : i32
    %c0_i32_0 = arith.constant 0 : i32
    %c0_i32_1 = arith.constant 0 : i32
    return %c0_i32, %c0_i32_0 : i32, i32
  }
  func.func @transform_3(%arg0: i32) -> (i32, i32, i32) {
    %c0_i32 = arith.constant 0 : i32
    %c0_i32_0 = arith.constant 0 : i32
    %c0_i32_1 = arith.constant 0 : i32
    return %arg0, %c0_i32, %c0_i32_0 : i32, i32, i32
  }
}

</mosaic_0001>

<llo_original>
// kernel: tpu_custom_call.1
$region0: #{tpu_custom_call.1}
  #allocation0 [shape = 'u32[]', space=smem, size = 0x4, offset = 0x4, fixed_abs, tag = 'smem constant byte address 0x4 - core index']
  #allocation1 [shape = 'u32[72,128]{1,0:T(1,128)}', space=vmem, size = 0x9000, scoped, tag = 'internal scratch']
  #allocation2 [shape = 'f32[64,32]{1,0:T(8,128)}', space=vmem, size = 0x8000, scoped, tag = 'scratch operand']
  %s0 = inlined_call_operand.vmem [shape: f32[2,64,16], index: 0, kind: input, shape index: {}]
  %s1 = inlined_call_operand.vmem [shape: f32[32,16], index: 1, kind: input, shape index: {}]
  %s2 = inlined_call_operand.vmem [shape: f32[16,32], index: 2, kind: input, shape index: {}]
  %s3 = inlined_call_operand.vmem [shape: f32[2,128,32], index: 3, kind: output, shape index: {}]
  %s4 = sld [smem:[#allocation0]]
  $region45: #{tpu_custom_call.1} parent=0
    _
  %s6 = ssub.s32 1, %s4
  %s7 = scalar_select 0, %s6, %s4
  loop: start=0, step=1, limit=4
  $region2: #{tpu_custom_call.1} parent=0 // loop_pre_header
    _
  $region3: #{tpu_custom_call.1} parent=0 // loop_header
    %s9 = sphi 0, %s13
    %p10 = scmp.ge.s32.totalorder %s9, 4
    %s19 = sphi 0, %s21
    %s22 = sphi 0, %s19
    %s23 = sphi 0, %s22
    %s39 = sphi 0, %s23
    %s43 = sphi 0, %s43
    %s45 = sphi 0, %s43
    %s46 = sphi 0, %s45
    %s60 = sphi 0, %s46
    %s64 = sphi 0, %s64
    %s66 = sphi 0, %s64
    %s67 = sphi 0, %s66
    %s81 = sphi 0, %s67
    %s87 = sphi 0, %s89
    %s90 = sphi 0, %s87
    %s91 = sphi 0, %s90
    %s107 = sphi 0, %s91
  $region4: #{tpu_custom_call.1} parent=0 // loop_header_branch
    %12 = sbr.rel (%p10) target = $region8
  $region5: #{tpu_custom_call.1} parent=0 // loop_body
    %s14 = ssub.s32 %s9, 1
    %s15 = ssub.s32 %s9, 2
    %s16 = sadd.s32 %s9, 1
    %s17 = ssub.s32 %s9, %s16
    %p18 = scmp.eq.s32.totalorder %s17, 0
    %s20 = sadd.s32 %s19, 1
    %s21 = scalar_select %p18, %s19, %s20
    %p24 = pneg %p18
    %p25 = scmp.eq.s32.totalorder %s9, 1
    %p26 = por %p24, %p25
    %p27 = scmp.ne.s32.totalorder %s19, %s22
    %p28 = scmp.eq.s32.totalorder %s9, 0
    %p29 = por %p27, %p28
    %p30 = scmp.ne.s32.totalorder %s19, %s22
    %p31 = scmp.eq.s32.totalorder %s14, 1
    %p32 = por %p30, %p31
    %p33 = scmp.ne.s32.totalorder %s22, %s23
    %p34 = scmp.eq.s32.totalorder %s14, 0
    %p35 = por %p33, %p34
    %p36 = scmp.ne.s32.totalorder %s22, %s23
    %p37 = scmp.eq.s32.totalorder %s15, 1
    %p38 = por %p36, %p37
    %p40 = scmp.ne.s32.totalorder %s23, %s39
    %p41 = scmp.eq.s32.totalorder %s15, 0
    %p42 = por %p40, %p41
    %s44 = sadd.s32 %s43, 1
    %p47 = scmp.eq.s32.totalorder %s9, 1
    %p48 = scmp.ne.s32.totalorder %s43, %s45
    %p49 = scmp.eq.s32.totalorder %s9, 0
    %p50 = por %p48, %p49
    %p51 = scmp.ne.s32.totalorder %s43, %s45
    %p52 = scmp.eq.s32.totalorder %s14, 1
    %p53 = por %p51, %p52
    %p54 = scmp.ne.s32.totalorder %s45, %s46
    %p55 = scmp.eq.s32.totalorder %s14, 0
    %p56 = por %p54, %p55
    %p57 = scmp.ne.s32.totalorder %s45, %s46
    %p58 = scmp.eq.s32.totalorder %s15, 1
    %p59 = por %p57, %p58
    %p61 = scmp.ne.s32.totalorder %s46, %s60
    %p62 = scmp.eq.s32.totalorder %s15, 0
    %p63 = por %p61, %p62
    %s65 = sadd.s32 %s64, 1
    %p68 = scmp.eq.s32.totalorder %s9, 1
    %p69 = scmp.ne.s32.totalorder %s64, %s66
    %p70 = scmp.eq.s32.totalorder %s9, 0
    %p71 = por %p69, %p70
    %p72 = scmp.ne.s32.totalorder %s64, %s66
    %p73 = scmp.eq.s32.totalorder %s14, 1
    %p74 = por %p72, %p73
    %p75 = scmp.ne.s32.totalorder %s66, %s67
    %p76 = scmp.eq.s32.totalorder %s14, 0
    %p77 = por %p75, %p76
    %p78 = scmp.ne.s32.totalorder %s66, %s67
    %p79 = scmp.eq.s32.totalorder %s15, 1
    %p80 = por %p78, %p79
    %p82 = scmp.ne.s32.totalorder %s67, %s81
    %p83 = scmp.eq.s32.totalorder %s15, 0
    %p84 = por %p82, %p83
    %s85 = ssub.s32 %s9, %s16
    %p86 = scmp.eq.s32.totalorder %s85, 0
    %s88 = sadd.s32 %s87, 1
    %s89 = scalar_select %p86, %s87, %s88
    %p92 = pneg %p86
    %p93 = scmp.eq.s32.totalorder %s9, 1
    %p94 = por %p92, %p93
    %p95 = scmp.ne.s32.totalorder %s87, %s90
    %p96 = scmp.eq.s32.totalorder %s9, 0
    %p97 = por %p95, %p96
    %p98 = scmp.ne.s32.totalorder %s87, %s90
    %p99 = scmp.eq.s32.totalorder %s14, 1
    %p100 = por %p98, %p99
    %p101 = scmp.ne.s32.totalorder %s90, %s91
    %p102 = scmp.eq.s32.totalorder %s14, 0
    %p103 = por %p101, %p102
    %p104 = scmp.ne.s32.totalorder %s90, %s91
    %p105 = scmp.eq.s32.totalorder %s15, 1
    %p106 = por %p104, %p105
    %p108 = scmp.ne.s32.totalorder %s91, %s107
    %p109 = scmp.eq.s32.totalorder %s15, 0
    %p110 = por %p108, %p109
    %p111 = scmp.le.s32.totalorder 1, %s9
    %p112 = scmp.lt.s32.totalorder %s9, 3
    %p113 = pnand %p111, %p112
    %p114 = pneg %p113
    // Predicated region
    $region9: #{tpu_custom_call.1} parent=5 // pred_check
      _
    $region10: #{tpu_custom_call.1} parent=5 // pred_check_branch
      %116 = sbr.rel (%p113) target = $region12
    $region11: #{tpu_custom_call.1} parent=5 // pred_region
      %s117 = ssub.s32 %s9, 1
      // Predicated region
      $region13: #{tpu_custom_call.1} parent=11 // pred_check
        %p118 = pneg %p56
      $region14: #{tpu_custom_call.1} parent=11 // pred_check_branch
        %120 = sbr.rel (%p118) target = $region16
      $region15: #{tpu_custom_call.1} parent=11 // pred_region
        _
      $region16: #{tpu_custom_call.1} parent=11 // pred_fallthru
        _
      // Predicated region
      $region17: #{tpu_custom_call.1} parent=11 // pred_check
        %p121 = pneg %p77
      $region18: #{tpu_custom_call.1} parent=11 // pred_check_branch
        %123 = sbr.rel (%p121) target = $region20
      $region19: #{tpu_custom_call.1} parent=11 // pred_region
        _
      $region20: #{tpu_custom_call.1} parent=11 // pred_fallthru
        _
    $region12: #{tpu_custom_call.1} parent=5 // pred_fallthru
      _
    %p124 = scmp.lt.s32.totalorder %s9, 2
    // Predicated region
    $region21: #{tpu_custom_call.1} parent=5 // pred_check
      %p125 = pneg %p124
    $region22: #{tpu_custom_call.1} parent=5 // pred_check_branch
      %127 = sbr.rel (%p125) target = $region24
    $region23: #{tpu_custom_call.1} parent=5 // pred_region
      // Predicated region
      $region25: #{tpu_custom_call.1} parent=23 // pred_check
        %p128 = pneg %p29
      $region26: #{tpu_custom_call.1} parent=23 // pred_check_branch
        %130 = sbr.rel (%p128) target = $region28
      $region27: #{tpu_custom_call.1} parent=23 // pred_region
        %p131 = scmp.lt.s32.totalorder %s9, 1
        %s132 = scalar_select %p131, %s9, 1
        %s133 = smul.addr %s132, 8
        %s134 = smul.addr %s133, 8
        %s135 = scalar_lea.vmem %s0, %s134
      $region28: #{tpu_custom_call.1} parent=23 // pred_fallthru
        _
    $region24: #{tpu_custom_call.1} parent=5 // pred_fallthru
      _
    %p136 = scmp.le.s32.totalorder 1, %s9
    %p137 = scmp.lt.s32.totalorder %s9, 3
    %p138 = pnand %p136, %p137
    %p139 = pneg %p138
    // Predicated region
    $region29: #{tpu_custom_call.1} parent=5 // pred_check
      _
    $region30: #{tpu_custom_call.1} parent=5 // pred_check_branch
      %141 = sbr.rel (%p138) target = $region32
    $region31: #{tpu_custom_call.1} parent=5 // pred_region
      %s142 = ssub.s32 %s9, 1
      %p143 = scmp.lt.s32.totalorder %s14, 1
      %s144 = scalar_select %p143, %s14, 1
      %s145 = smul.addr %s144, 8
      %s146 = smul.addr %s145, 8
      %s147 = scalar_lea.vmem %s0, %s146
      %p148 = pneg %p35
      %p149 = pneg %p32
      %p150 = pneg %p56
      %p151 = pneg %p53
      %p152 = pneg %p77
      %p153 = pneg %p74
      %p154 = pneg %p103
      %p155 = pneg %p100
      %p156 = scmp.lt.s32.totalorder %s14, 1
      %s157 = scalar_select %p156, %s14, 1
      %s158 = smul.addr %s157, 16
      %s159 = smul.addr %s158, 8
      %s160 = scalar_lea.vmem %s3, %s159
      %p161 = scmp.lt.s32.totalorder %s14, 1
      %s162 = scalar_select %p161, %s14, 1
      %s163 = smul.addr %s162, 8
      %s164 = smul.addr %s163, 8
      %s165 = scalar_lea.vmem %s0, %s164
      %p166 = scmp.lt.s32.totalorder %s14, 1
      %s167 = scalar_select %p166, %s14, 1
      %s168 = smul.addr %s167, 16
      %s169 = smul.addr %s168, 8
      %s170 = scalar_lea.vmem %s3, %s169
      %v171 = vld [vmem:[%s1] sm:$0xff]
      %v172 = vld [vmem:[%s1 + $0x8] sm:$0xff]
      %v173 = vld [vmem:[%s1 + $0x10] sm:$0xff]
      %v174 = vld [vmem:[%s1 + $0x18] sm:$0xff]
      %v175 = vld [vmem:[%s2] sm:$0xff]
      %v176 = vld [vmem:[%s2 + $0x8] sm:$0xff]
      %v177 = vld [vmem:[%s165] sm:$0xff]
      %v178 = vld [vmem:[%s165 + $0x8] sm:$0xff]
      %v179 = vld [vmem:[%s165 + $0x10] sm:$0xff]
      %v180 = vld [vmem:[%s165 + $0x18] sm:$0xff]
      %v181 = vld [vmem:[%s165 + $0x20] sm:$0xff]
      %v182 = vld [vmem:[%s165 + $0x28] sm:$0xff]
      %v183 = vld [vmem:[%s165 + $0x30] sm:$0xff]
      %v184 = vld [vmem:[%s165 + $0x38] sm:$0xff]
      %vm185 = vcmask 130048
      %v187 = vsel %vm185, %v177, 0
      %v190 = vsel %vm185, %v178, 0
      %v193 = vsel %vm185, %v179, 0
      %v196 = vsel %vm185, %v180, 0
      %v199 = vsel %vm185, %v181, 0
      %v202 = vsel %vm185, %v182, 0
      %v205 = vsel %vm185, %v183, 0
      %v208 = vsel %vm185, %v184, 0
      %210 = vmatpush.msra.mxu0 0.0
      %211 = vmatpush.msra.mxu0 0.0
      %212 = vmatpush.msra.mxu0 0.0
      %213 = vmatpush.msra.mxu0 0.0
      %214 = vmatpush.msra.mxu0 0.0
      %215 = vmatpush.msra.mxu0 0.0
      %216 = vmatpush.msra.mxu0 0.0
      %217 = vmatpush.msra.mxu0 0.0
      %218 = vmatpush.msra.mxu0 0.0
      %219 = vmatpush.msra.mxu0 0.0
      %220 = vmatpush.msra.mxu0 0.0
      %221 = vmatpush.msra.mxu0 0.0
      %222 = vmatpush.msra.mxu0 0.0
      %223 = vmatpush.msra.mxu0 0.0
      %224 = vmatpush.msra.mxu0 %v176
      %225 = vmatpush.msra.mxu0 %v175
      %226 = vmatmul.f32.gmra.mxu0 %v187
      %v227 = vpop.f32.mrf.mxu0
      %v228 = vadd.f32 0.0, %v227
      %229 = vmatmul.f32.gmra.mxu0 %v190
      %v230 = vpop.f32.mrf.mxu0
      %v231 = vadd.f32 0.0, %v230
      %232 = vmatmul.f32.gmra.mxu0 %v193
      %v233 = vpop.f32.mrf.mxu0
      %v234 = vadd.f32 0.0, %v233
      %235 = vmatmul.f32.gmra.mxu0 %v196
      %v236 = vpop.f32.mrf.mxu0
      %v237 = vadd.f32 0.0, %v236
      %238 = vmatmul.f32.gmra.mxu0 %v199
      %v239 = vpop.f32.mrf.mxu0
      %v240 = vadd.f32 0.0, %v239
      %241 = vmatmul.f32.gmra.mxu0 %v202
      %v242 = vpop.f32.mrf.mxu0
      %v243 = vadd.f32 0.0, %v242
      %244 = vmatmul.f32.gmra.mxu0 %v205
      %v245 = vpop.f32.mrf.mxu0
      %v246 = vadd.f32 0.0, %v245
      %247 = vmatmul.f32.gmra.mxu0 %v208
      %v248 = vpop.f32.mrf.mxu0
      %v249 = vadd.f32 0.0, %v248
      %250 = vdwg.mxu0
      %vm251 = vcmask 261120
      %252 = vst.msk [vmem:[#allocation2] sm:$0xff] %vm251, %v228
      %253 = vst.msk [vmem:[#allocation2 + $0x8] sm:$0xff] %vm251, %v231
      %254 = vst.msk [vmem:[#allocation2 + $0x10] sm:$0xff] %vm251, %v234
      %255 = vst.msk [vmem:[#allocation2 + $0x18] sm:$0xff] %vm251, %v237
      %256 = vst.msk [vmem:[#allocation2 + $0x20] sm:$0xff] %vm251, %v240
      %257 = vst.msk [vmem:[#allocation2 + $0x28] sm:$0xff] %vm251, %v243
      %258 = vst.msk [vmem:[#allocation2 + $0x30] sm:$0xff] %vm251, %v246
      %259 = vst.msk [vmem:[#allocation2 + $0x38] sm:$0xff] %vm251, %v249
      %v260 = vld [vmem:[#allocation2] sm:$0xff]
      %v261 = vld [vmem:[#allocation2 + $0x8] sm:$0xff]
      %v263 = vsel %vm185, %v171, 0
      %v266 = vsel %vm185, %v172, 0
      %v269 = vsel %vm185, %v173, 0
      %v272 = vsel %vm185, %v174, 0
      %274 = vmatpush.msra.mxu0 0.0
      %275 = vmatpush.msra.mxu0 0.0
      %276 = vmatpush.msra.mxu0 0.0
      %277 = vmatpush.msra.mxu0 0.0
      %278 = vmatpush.msra.mxu0 0.0
      %279 = vmatpush.msra.mxu0 0.0
      %280 = vmatpush.msra.mxu0 0.0
      %281 = vmatpush.msra.mxu0 0.0
      %282 = vmatpush.msra.mxu0 0.0
      %283 = vmatpush.msra.mxu0 0.0
      %284 = vmatpush.msra.mxu0 0.0
      %285 = vmatpush.msra.mxu0 0.0
      %286 = vmatpush.msra.mxu0 0.0
      %287 = vmatpush.msra.mxu0 0.0
      %288 = vmatpush.msra.mxu0 %v261
      %289 = vmatpush.msra.mxu0 %v260
      %290 = vmatmul.f32.gmra.mxu0 %v263
      %v291 = vpop.f32.mrf.mxu0
      %v292 = vadd.f32 0.0, %v291
      %293 = vmatmul.f32.gmra.mxu0 %v266
      %v294 = vpop.f32.mrf.mxu0
      %v295 = vadd.f32 0.0, %v294
      %296 = vmatmul.f32.gmra.mxu0 %v269
      %v297 = vpop.f32.mrf.mxu0
      %v298 = vadd.f32 0.0, %v297
      %299 = vmatmul.f32.gmra.mxu0 %v272
      %v300 = vpop.f32.mrf.mxu0
      %v301 = vadd.f32 0.0, %v300
      %302 = vdwg.mxu0
      %303 = vst.msk [vmem:[%s170] sm:$0xff] %vm251, %v292
      %304 = vst.msk [vmem:[%s170 + $0x8] sm:$0xff] %vm251, %v295
      %305 = vst.msk [vmem:[%s170 + $0x10] sm:$0xff] %vm251, %v298
      %306 = vst.msk [vmem:[%s170 + $0x18] sm:$0xff] %vm251, %v301
      %s307 = scalar_lea.vmem [#allocation2], 16
      %v308 = vld [vmem:[%s307] sm:$0xff]
      %v309 = vld [vmem:[%s307 + $0x8] sm:$0xff]
      %310 = vmatpush.msra.mxu0 0.0
      %311 = vmatpush.msra.mxu0 0.0
      %312 = vmatpush.msra.mxu0 0.0
      %313 = vmatpush.msra.mxu0 0.0
      %314 = vmatpush.msra.mxu0 0.0
      %315 = vmatpush.msra.mxu0 0.0
      %316 = vmatpush.msra.mxu0 0.0
      %317 = vmatpush.msra.mxu0 0.0
      %318 = vmatpush.msra.mxu0 0.0
      %319 = vmatpush.msra.mxu0 0.0
      %320 = vmatpush.msra.mxu0 0.0
      %321 = vmatpush.msra.mxu0 0.0
      %322 = vmatpush.msra.mxu0 0.0
      %323 = vmatpush.msra.mxu0 0.0
      %324 = vmatpush.msra.mxu0 %v309
      %325 = vmatpush.msra.mxu0 %v308
      %326 = vmatmul.f32.gmra.mxu0 %v263
      %v327 = vpop.f32.mrf.mxu0
      %v328 = vadd.f32 0.0, %v327
      %329 = vmatmul.f32.gmra.mxu0 %v266
      %v330 = vpop.f32.mrf.mxu0
      %v331 = vadd.f32 0.0, %v330
      %332 = vmatmul.f32.gmra.mxu0 %v269
      %v333 = vpop.f32.mrf.mxu0
      %v334 = vadd.f32 0.0, %v333
      %335 = vmatmul.f32.gmra.mxu0 %v272
      %v336 = vpop.f32.mrf.mxu0
      %v337 = vadd.f32 0.0, %v336
      %338 = vdwg.mxu0
      %s339 = scalar_lea.vmem %s170, 32
      %340 = vst.msk [vmem:[%s339] sm:$0xff] %vm251, %v328
      %341 = vst.msk [vmem:[%s339 + $0x8] sm:$0xff] %vm251, %v331
      %342 = vst.msk [vmem:[%s339 + $0x10] sm:$0xff] %vm251, %v334
      %343 = vst.msk [vmem:[%s339 + $0x18] sm:$0xff] %vm251, %v337
      %s344 = scalar_lea.vmem [#allocation2], 32
      %v345 = vld [vmem:[%s344] sm:$0xff]
      %v346 = vld [vmem:[%s344 + $0x8] sm:$0xff]
      %347 = vmatpush.msra.mxu0 0.0
      %348 = vmatpush.msra.mxu0 0.0
      %349 = vmatpush.msra.mxu0 0.0
      %350 = vmatpush.msra.mxu0 0.0
      %351 = vmatpush.msra.mxu0 0.0
      %352 = vmatpush.msra.mxu0 0.0
      %353 = vmatpush.msra.mxu0 0.0
      %354 = vmatpush.msra.mxu0 0.0
      %355 = vmatpush.msra.mxu0 0.0
      %356 = vmatpush.msra.mxu0 0.0
      %357 = vmatpush.msra.mxu0 0.0
      %358 = vmatpush.msra.mxu0 0.0
      %359 = vmatpush.msra.mxu0 0.0
      %360 = vmatpush.msra.mxu0 0.0
      %361 = vmatpush.msra.mxu0 %v346
      %362 = vmatpush.msra.mxu0 %v345
      %363 = vmatmul.f32.gmra.mxu0 %v263
      %v364 = vpop.f32.mrf.mxu0
      %v365 = vadd.f32 0.0, %v364
      %366 = vmatmul.f32.gmra.mxu0 %v266
      %v367 = vpop.f32.mrf.mxu0
      %v368 = vadd.f32 0.0, %v367
      %369 = vmatmul.f32.gmra.mxu0 %v269
      %v370 = vpop.f32.mrf.mxu0
      %v371 = vadd.f32 0.0, %v370
      %372 = vmatmul.f32.gmra.mxu0 %v272
      %v373 = vpop.f32.mrf.mxu0
      %v374 = vadd.f32 0.0, %v373
      %375 = vdwg.mxu0
      %s376 = scalar_lea.vmem %s170, 64
      %377 = vst.msk [vmem:[%s376] sm:$0xff] %vm251, %v365
      %378 = vst.msk [vmem:[%s376 + $0x8] sm:$0xff] %vm251, %v368
      %379 = vst.msk [vmem:[%s376 + $0x10] sm:$0xff] %vm251, %v371
      %380 = vst.msk [vmem:[%s376 + $0x18] sm:$0xff] %vm251, %v374
      %s381 = scalar_lea.vmem [#allocation2], 48
      %v382 = vld [vmem:[%s381] sm:$0xff]
      %v383 = vld [vmem:[%s381 + $0x8] sm:$0xff]
      %384 = vmatpush.msra.mxu0 0.0
      %385 = vmatpush.msra.mxu0 0.0
      %386 = vmatpush.msra.mxu0 0.0
      %387 = vmatpush.msra.mxu0 0.0
      %388 = vmatpush.msra.mxu0 0.0
      %389 = vmatpush.msra.mxu0 0.0
      %390 = vmatpush.msra.mxu0 0.0
      %391 = vmatpush.msra.mxu0 0.0
      %392 = vmatpush.msra.mxu0 0.0
      %393 = vmatpush.msra.mxu0 0.0
      %394 = vmatpush.msra.mxu0 0.0
      %395 = vmatpush.msra.mxu0 0.0
      %396 = vmatpush.msra.mxu0 0.0
      %397 = vmatpush.msra.mxu0 0.0
      %398 = vmatpush.msra.mxu0 %v383
      %399 = vmatpush.msra.mxu0 %v382
      %400 = vmatmul.f32.gmra.mxu0 %v263
      %v401 = vpop.f32.mrf.mxu0
      %v402 = vadd.f32 0.0, %v401
      %403 = vmatmul.f32.gmra.mxu0 %v266
      %v404 = vpop.f32.mrf.mxu0
      %v405 = vadd.f32 0.0, %v404
      %406 = vmatmul.f32.gmra.mxu0 %v269
      %v407 = vpop.f32.mrf.mxu0
      %v408 = vadd.f32 0.0, %v407
      %409 = vmatmul.f32.gmra.mxu0 %v272
      %v410 = vpop.f32.mrf.mxu0
      %v411 = vadd.f32 0.0, %v410
      %412 = vdwg.mxu0
      %s413 = scalar_lea.vmem %s170, 96
      %414 = vst.msk [vmem:[%s413] sm:$0xff] %vm251, %v402
      %415 = vst.msk [vmem:[%s413 + $0x8] sm:$0xff] %vm251, %v405
      %416 = vst.msk [vmem:[%s413 + $0x10] sm:$0xff] %vm251, %v408
      %417 = vst.msk [vmem:[%s413 + $0x18] sm:$0xff] %vm251, %v411
      %p418 = scmp.lt.s32.totalorder %s14, 1
      %s419 = scalar_select %p418, %s14, 1
      %s420 = smul.addr %s419, 16
      %s421 = smul.addr %s420, 8
      %s422 = scalar_lea.vmem %s3, %s421
      // Predicated region
      $region33: #{tpu_custom_call.1} parent=31 // pred_check
        %p423 = pneg %p100
      $region34: #{tpu_custom_call.1} parent=31 // pred_check_branch
        %425 = sbr.rel (%p423) target = $region36
      $region35: #{tpu_custom_call.1} parent=31 // pred_region
        _
      $region36: #{tpu_custom_call.1} parent=31 // pred_fallthru
        _
    $region32: #{tpu_custom_call.1} parent=5 // pred_fallthru
      _
    %p426 = scmp.le.s32.totalorder 2, %s9
    // Predicated region
    $region37: #{tpu_custom_call.1} parent=5 // pred_check
      %p427 = pneg %p426
    $region38: #{tpu_custom_call.1} parent=5 // pred_check_branch
      %429 = sbr.rel (%p427) target = $region40
    $region39: #{tpu_custom_call.1} parent=5 // pred_region
      %s430 = ssub.s32 %s9, 2
      // Predicated region
      $region41: #{tpu_custom_call.1} parent=39 // pred_check
        %p431 = pneg %p106
      $region42: #{tpu_custom_call.1} parent=39 // pred_check_branch
        %433 = sbr.rel (%p431) target = $region44
      $region43: #{tpu_custom_call.1} parent=39 // pred_region
        %p434 = scmp.lt.s32.totalorder %s15, 1
        %s435 = scalar_select %p434, %s15, 1
        %s436 = smul.addr %s435, 16
        %s437 = smul.addr %s436, 8
        %s438 = scalar_lea.vmem %s3, %s437
      $region44: #{tpu_custom_call.1} parent=39 // pred_fallthru
        _
    $region40: #{tpu_custom_call.1} parent=5 // pred_fallthru
      _
  $region6: #{tpu_custom_call.1} parent=0 // loop_footer
    %s13 = sadd.s32 1, %s9
  $region7: #{tpu_custom_call.1} parent=0 // loop_footer_branch
    %8 = sbr.rel target = $region3
  $region8: #{tpu_custom_call.1} parent=0 // loop_exit
    _

</llo_original>
